<compile_context>
chip_gen: v6e
topology: v6e:2x2x1
jax: 0.10.0
libtpu: 0.0.40
codegen_flags: <defaults>
</compile_context>

<pallas_src>
import functools

import jax
import jax.numpy as jnp
from jax.experimental import pallas as pl
from jax.experimental.pallas import tpu as pltpu

MARGIN = 2.0
EMB_DIM = 128
BN_EPS = 1e-3          # BatchNorm1d eps used by facenet_pytorch's last_bn
PD_EPS = 1e-6          # F.pairwise_distance default eps
NORM_EPS = 1e-12       # F.normalize default eps


def _cdiv(a, b):
    return -(-a // b)


def _round_up(x, m):
    return _cdiv(x, m) * m


def _vmem_limit_bytes():
    """Per-generation scoped-VMEM limit (v5e/v6e: 128 MiB phys, v7x: 64 MiB)."""
    cap = 64 * 1024 * 1024
    try:
        info = pltpu.get_tpu_info()
        cap = int(getattr(info, "vmem_capacity_bytes", cap))
    except Exception:
        pass
    return max(16 * 1024 * 1024, min(cap * 3 // 4, 96 * 1024 * 1024))


def _pick_tiles(F, D, B, budget_bytes):
    """Largest K tile (multiple of 128) whose double-buffered tiles fit budget."""
    f128 = _round_up(F, 128)
    fixed = 2 * B * D * 4 + 4 * D * 4 + (64 << 10)   # f32 accumulators + scale/shift + slack
    per_tk = 4 * D + 8 * B                            # dbl-buffered bf16 w + x1 + x2 per K elem
    tk = max(128, ((max(budget_bytes - fixed, 0)) // per_tk) // 128 * 128)
    tk = min(tk, f128)
    grid_k = _cdiv(f128, tk)
    tk = _round_up(_cdiv(f128, grid_k), 128)          # rebalance: minimize K padding
    return tk, grid_k, grid_k * tk


def prepare_head(w, gamma, beta, running_mean, running_var, bn_eps=BN_EPS):
    """One-time prep of the embedding head (cached across loss calls)."""
    F, D = w.shape
    vmem_limit = _vmem_limit_bytes()
    tk, grid_k, f_pad = _pick_tiles(F, D, B=8, budget_bytes=(vmem_limit * 7) // 10)

    w_bf16 = w.astype(jnp.bfloat16)
    if f_pad > F:
        w_bf16 = jnp.pad(w_bf16, ((0, f_pad - F), (0, 0)))

    inv_std = 1.0 / jnp.sqrt(running_var.astype(jnp.float32) + bn_eps)
    g = gamma.astype(jnp.float32)
    scale = (g * inv_std).reshape(1, D)
    shift = (beta.astype(jnp.float32)
             - running_mean.astype(jnp.float32) * g * inv_std).reshape(1, D)

    return dict(w=w_bf16, scale=scale, shift=shift, F=F,
                tk=tk, grid_k=grid_k, vmem_limit=vmem_limit)


# ---------------------------------------------------------------------------
# Fused kernel: K-tiled matmul accumulate -> (on last K step) BN affine,
# L2 normalize, pairwise distance and contrastive-loss reduction.
#
#   label_ref : [1]        int32  SMEM scalar-prefetch (same_label)
#   x1_ref    : [B, tk]    bf16
#   x2_ref    : [B, tk]    bf16
#   w_ref     : [tk, D]    bf16
#   scale_ref : [1, D]     f32    (BN scale)
#   shift_ref : [1, D]     f32    (BN shift)
#   loss_ref  : [1, 1]     f32
#   acc*_ref  : [B, D]     f32    VMEM scratch accumulators
# ---------------------------------------------------------------------------
def _fused_kernel(label_ref, x1_ref, x2_ref, w_ref, scale_ref, shift_ref,
                  loss_ref, acc1_ref, acc2_ref, *, margin):
    k = pl.program_id(0)

    @pl.when(k == 0)
    def _():
        acc1_ref[...] = jnp.zeros_like(acc1_ref)
        acc2_ref[...] = jnp.zeros_like(acc2_ref)

    w = w_ref[...]
    acc1_ref[...] += jnp.dot(x1_ref[...], w, preferred_element_type=jnp.float32)
    acc2_ref[...] += jnp.dot(x2_ref[...], w, preferred_element_type=jnp.float32)

    @pl.when(k == pl.num_programs(0) - 1)
    def _():
        scale = scale_ref[...]
        shift = shift_ref[...]
        # Eval-mode BatchNorm1d affine.
        z1 = acc1_ref[...] * scale + shift
        z2 = acc2_ref[...] * scale + shift
        # F.normalize(p=2, dim=1): z / max(||z||, 1e-12)  (rsqrt -> EUP slot)
        inv1 = jax.lax.rsqrt(jnp.maximum(jnp.sum(z1 * z1, -1, keepdims=True),
                                         NORM_EPS * NORM_EPS))
        inv2 = jax.lax.rsqrt(jnp.maximum(jnp.sum(z2 * z2, -1, keepdims=True),
                                         NORM_EPS * NORM_EPS))
        e1 = z1 * inv1
        e2 = z2 * inv2
        # F.pairwise_distance(p=2) adds eps to the difference.
        diff = e1 - e2 + PD_EPS
        d2 = jnp.sum(diff * diff, -1, keepdims=True)      # [B, 1]
        dist = jnp.sqrt(d2)

        label = label_ref[0].astype(jnp.float32)          # runtime SMEM scalar
        pos = (1.0 - label) * d2                          # dist**2
        neg = label * jnp.square(jnp.maximum(margin - dist, 0.0))
        loss_ref[...] = jnp.mean(pos + neg, keepdims=True)


@functools.partial(jax.jit, static_argnames=("grid_k", "margin", "vmem_limit"))
def _fused_loss(label_arr, output1, output2, w_pad, scale, shift, *,
                grid_k, margin, vmem_limit):
    B = output1.shape[0]
    f_pad, D = w_pad.shape
    tk = f_pad // grid_k

    # Cast activations straight to bf16 (no f32 intermediate, no concat).
    x1 = output1.reshape(B, -1).astype(jnp.bfloat16)
    x2 = output2.reshape(B, -1).astype(jnp.bfloat16)
    F = x1.shape[1]
    if f_pad > F:
        x1 = jnp.pad(x1, ((0, 0), (0, f_pad - F)))
        x2 = jnp.pad(x2, ((0, 0), (0, f_pad - F)))

    kern = functools.partial(_fused_kernel, margin=float(margin))

    # TODO(synk): on v7x (2 TCs/chip) split the K reduction across the cores
    # (leading "parallel" axis + partial-sum combine); single reduction axis
    # kept here since v5e/v6e have one TensorCore.
    return pl.pallas_call(
        kern,
        out_shape=jax.ShapeDtypeStruct((1, 1), jnp.float32),
        grid_spec=pltpu.PrefetchScalarGridSpec(
            num_scalar_prefetch=1,
            grid=(grid_k,),
            in_specs=[
                pl.BlockSpec((B, tk), lambda k, lbl: (0, k)),
                pl.BlockSpec((B, tk), lambda k, lbl: (0, k)),
                pl.BlockSpec((tk, D), lambda k, lbl: (k, 0)),
                pl.BlockSpec((1, D), lambda k, lbl: (0, 0)),
                pl.BlockSpec((1, D), lambda k, lbl: (0, 0)),
            ],
            out_specs=pl.BlockSpec((1, 1), lambda k, lbl: (0, 0)),
            scratch_shapes=[pltpu.VMEM((B, D), jnp.float32),
                            pltpu.VMEM((B, D), jnp.float32)],
        ),
        compiler_params=pltpu.CompilerParams(
            dimension_semantics=("arbitrary",),           # K is a reduction axis
            vmem_limit_bytes=int(vmem_limit)),
    )(label_arr, x1, x2, w_pad, scale, shift)


def deep_contrastive_loss(output1, output2, same_label, head, margin=MARGIN):
    """Forward pass of DeepContrastiveLoss (same_label may be bool or array)."""
    label_arr = jnp.asarray(same_label, dtype=jnp.int32).reshape((1,))
    loss = _fused_loss(label_arr, output1, output2, head["w"], head["scale"],
                       head["shift"], grid_k=head["grid_k"],
                       margin=float(margin), vmem_limit=head["vmem_limit"])
    return loss[0, 0]


# ---------------------------------------------------------------------------
# Pure-JAX reference (same math, same bf16 quantization) for sanity.
# ---------------------------------------------------------------------------
def _reference(output1, output2, same_label, w, bn_scale, bn_shift, margin=MARGIN):
    B = output1.shape[0]
    w_bf = w.astype(jnp.bfloat16)

    def emb(x):
        xb = x.reshape(B, -1).astype(jnp.bfloat16)
        z = jnp.dot(xb, w_bf, preferred_element_type=jnp.float32)
        z = z * bn_scale.reshape(1, -1) + bn_shift.reshape(1, -1)
        n = jnp.sqrt(jnp.sum(z * z, axis=-1, keepdims=True))
        return z / jnp.maximum(n, NORM_EPS)

    e1, e2 = emb(output1), emb(output2)
    diff = e1 - e2 + PD_EPS
    dist = jnp.sqrt(jnp.sum(diff * diff, axis=-1))
    label = float(int(same_label))
    pos = (1.0 - label) * dist ** 2
    neg = label * jnp.square(jnp.maximum(margin - dist, 0.0))
    return jnp.mean(pos + neg)


if __name__ == "__main__":
    key = jax.random.PRNGKey(0)
    k1, k2, kw = jax.random.split(key, 3)

    # Small synthetic shapes: batch=2, channels=4, spatial=16x16  (NCHW)
    B, C, H, W = 2, 4, 16, 16
    F = C * H * W

    output1 = jax.random.normal(k1, (B, C, H, W), dtype=jnp.float32)
    output2 = jax.random.normal(k2, (B, C, H, W), dtype=jnp.float32)

    # Deterministic "resnet head" parameters (linear + eval-mode BatchNorm1d).
    w = jax.random.normal(kw, (F, EMB_DIM), dtype=jnp.float32) * 0.02
    gamma = jnp.ones((EMB_DIM,), jnp.float32)
    beta = jnp.zeros((EMB_DIM,), jnp.float32)
    running_mean = jnp.zeros((EMB_DIM,), jnp.float32)
    running_var = jnp.ones((EMB_DIM,), jnp.float32)

    head = prepare_head(w, gamma, beta, running_mean, running_var)   # one-time prep

    inv_std = 1.0 / jnp.sqrt(running_var + BN_EPS)
    bn_scale = gamma * inv_std
    bn_shift = beta - running_mean * gamma * inv_std

    # same_label = True branch
    loss_t = deep_contrastive_loss(output1, output2, True, head)
    loss_t = jax.block_until_ready(loss_t)
    ref_t = _reference(output1, output2, True, w, bn_scale, bn_shift)
    assert jnp.allclose(loss_t, ref_t, atol=1e-4, rtol=1e-4), (loss_t, ref_t)

    # same_label = False branch (same compile: label is a runtime scalar)
    loss_f = deep_contrastive_loss(output1, output2, False, head)
    loss_f = jax.block_until_ready(loss_f)
    ref_f = _reference(output1, output2, False, w, bn_scale, bn_shift)
    assert jnp.allclose(loss_f, ref_f, atol=1e-4, rtol=1e-4), (loss_f, ref_f)

    print("KERNEL_OK")
</pallas_src>

<mosaic_0001>
module attributes {stable_mosaic.version = 11 : i64} {
  func.func @_fused_kernel(%arg0: i32, %arg1: memref<1xi32, #tpu.memory_space<smem>>, %arg2: memref<2x1024xbf16, #tpu.memory_space<vmem>>, %arg3: memref<2x1024xbf16, #tpu.memory_space<vmem>>, %arg4: memref<1024x128xbf16, #tpu.memory_space<vmem>>, %arg5: memref<1x128xf32, #tpu.memory_space<vmem>>, %arg6: memref<1x128xf32, #tpu.memory_space<vmem>>, %arg7: memref<1x1xf32, #tpu.memory_space<vmem>>, %arg8: memref<2x128xf32, #tpu.memory_space<vmem>>, %arg9: memref<2x128xf32, #tpu.memory_space<vmem>>) attributes {dimension_semantics = [#tpu.dimension_semantics<arbitrary>], iteration_bounds = array<i64: 1>, scalar_prefetch = 1 : i64, scratch_operands = 2 : i64, tpu.core_type = #tpu.core_type<tc>, window_params = [{transform_indices = @transform_0, window_bounds = array<i64: 2, 1024>}, {transform_indices = @transform_1, window_bounds = array<i64: 2, 1024>}, {transform_indices = @transform_2, window_bounds = array<i64: 1024, 128>}, {pipeline_mode = #tpu.pipeline_mode<synchronous>, transform_indices = @transform_3, window_bounds = array<i64: 1, 128>}, {pipeline_mode = #tpu.pipeline_mode<synchronous>, transform_indices = @transform_4, window_bounds = array<i64: 1, 128>}, {pipeline_mode = #tpu.pipeline_mode<synchronous>, transform_indices = @transform_5, window_bounds = array<i64: 1, 1>}]} {
    %c0_i32 = arith.constant 0 : i32
    %0 = arith.cmpi eq, %arg0, %c0_i32 : i32
    %1 = arith.extui %0 : i1 to i32
    %c0_i32_0 = arith.constant 0 : i32
    %2 = arith.cmpi ne, %1, %c0_i32_0 : i32
    scf.if %2 {
      %cst_17 = arith.constant 0.000000e+00 : f32
      %17 = vector.broadcast %cst_17 : f32 to vector<2x128xf32>
      %c0_18 = arith.constant 0 : index
      %c0_19 = arith.constant 0 : index
      %18 = vector.load %arg8[%c0_18, %c0_19] : memref<2x128xf32, #tpu.memory_space<vmem>>, vector<2x128xf32>
      tpu.vector_store %arg8[%c0_18, %c0_19], %17 {strides = array<i32>} : memref<2x128xf32, #tpu.memory_space<vmem>>, vector<2x128xf32>,
      %cst_20 = arith.constant 0.000000e+00 : f32
      %19 = vector.broadcast %cst_20 : f32 to vector<2x128xf32>
      %c0_21 = arith.constant 0 : index
      %c0_22 = arith.constant 0 : index
      %20 = vector.load %arg9[%c0_21, %c0_22] : memref<2x128xf32, #tpu.memory_space<vmem>>, vector<2x128xf32>
      tpu.vector_store %arg9[%c0_21, %c0_22], %19 {strides = array<i32>} : memref<2x128xf32, #tpu.memory_space<vmem>>, vector<2x128xf32>,
    } else {
    }
    %c0 = arith.constant 0 : index
    %c0_1 = arith.constant 0 : index
    %3 = vector.load %arg4[%c0, %c0_1] : memref<1024x128xbf16, #tpu.memory_space<vmem>>, vector<1024x128xbf16>
    %c0_2 = arith.constant 0 : index
    %c0_3 = arith.constant 0 : index
    %4 = vector.load %arg8[%c0_2, %c0_3] : memref<2x128xf32, #tpu.memory_space<vmem>>, vector<2x128xf32>
    %c0_4 = arith.constant 0 : index
    %c0_5 = arith.constant 0 : index
    %5 = vector.load %arg2[%c0_4, %c0_5] : memref<2x1024xbf16, #tpu.memory_space<vmem>>, vector<2x1024xbf16>
    %cst = arith.constant dense<0.000000e+00> : vector<2x128xf32>
    %6 = tpu.matmul %5, %3, %cst {dimension_numbers = #tpu.dot_dimension_numbers<[1], [0], [0], [1], [0, 0, 1, 1], [], []>} : vector<2x1024xbf16>, vector<1024x128xbf16>, vector<2x128xf32> -> vector<2x128xf32>
    %7 = arith.addf %4, %6 : vector<2x128xf32>
    %c0_6 = arith.constant 0 : index
    %c0_7 = arith.constant 0 : index
    %8 = vector.load %arg8[%c0_6, %c0_7] : memref<2x128xf32, #tpu.memory_space<vmem>>, vector<2x128xf32>
    tpu.vector_store %arg8[%c0_6, %c0_7], %7 {strides = array<i32>} : memref<2x128xf32, #tpu.memory_space<vmem>>, vector<2x128xf32>,
    %c0_8 = arith.constant 0 : index
    %c0_9 = arith.constant 0 : index
    %9 = vector.load %arg9[%c0_8, %c0_9] : memref<2x128xf32, #tpu.memory_space<vmem>>, vector<2x128xf32>
    %c0_10 = arith.constant 0 : index
    %c0_11 = arith.constant 0 : index
    %10 = vector.load %arg3[%c0_10, %c0_11] : memref<2x1024xbf16, #tpu.memory_space<vmem>>, vector<2x1024xbf16>
    %cst_12 = arith.constant dense<0.000000e+00> : vector<2x128xf32>
    %11 = tpu.matmul %10, %3, %cst_12 {dimension_numbers = #tpu.dot_dimension_numbers<[1], [0], [0], [1], [0, 0, 1, 1], [], []>} : vector<2x1024xbf16>, vector<1024x128xbf16>, vector<2x128xf32> -> vector<2x128xf32>
    %12 = arith.addf %9, %11 : vector<2x128xf32>
    %c0_13 = arith.constant 0 : index
    %c0_14 = arith.constant 0 : index
    %13 = vector.load %arg9[%c0_13, %c0_14] : memref<2x128xf32, #tpu.memory_space<vmem>>, vector<2x128xf32>
    tpu.vector_store %arg9[%c0_13, %c0_14], %12 {strides = array<i32>} : memref<2x128xf32, #tpu.memory_space<vmem>>, vector<2x128xf32>,
    %c0_i32_15 = arith.constant 0 : i32
    %14 = arith.cmpi eq, %arg0, %c0_i32_15 : i32
    %15 = arith.extui %14 : i1 to i32
    %c0_i32_16 = arith.constant 0 : i32
    %16 = arith.cmpi ne, %15, %c0_i32_16 : i32
    scf.if %16 {
      %c0_17 = arith.constant 0 : index
      %c0_18 = arith.constant 0 : index
      %17 = vector.load %arg5[%c0_17, %c0_18] : memref<1x128xf32, #tpu.memory_space<vmem>>, vector<1x128xf32>
      %c0_19 = arith.constant 0 : index
      %c0_20 = arith.constant 0 : index
      %18 = vector.load %arg6[%c0_19, %c0_20] : memref<1x128xf32, #tpu.memory_space<vmem>>, vector<1x128xf32>
      %c0_21 = arith.constant 0 : index
      %c0_22 = arith.constant 0 : index
      %19 = vector.load %arg8[%c0_21, %c0_22] : memref<2x128xf32, #tpu.memory_space<vmem>>, vector<2x128xf32>
      %20 = vector.broadcast %17 : vector<1x128xf32> to vector<2x128xf32>
      %21 = arith.mulf %19, %20 : vector<2x128xf32>
      %22 = vector.broadcast %18 : vector<1x128xf32> to vector<2x128xf32>
      %23 = arith.addf %21, %22 : vector<2x128xf32>
      %c0_23 = arith.constant 0 : index
      %c0_24 = arith.constant 0 : index
      %24 = vector.load %arg9[%c0_23, %c0_24] : memref<2x128xf32, #tpu.memory_space<vmem>>, vector<2x128xf32>
      %25 = vector.broadcast %17 : vector<1x128xf32> to vector<2x128xf32>
      %26 = arith.mulf %24, %25 : vector<2x128xf32>
      %27 = vector.broadcast %18 : vector<1x128xf32> to vector<2x128xf32>
      %28 = arith.addf %26, %27 : vector<2x128xf32>
      %29 = arith.mulf %23, %23 : vector<2x128xf32>
      %cst_25 = arith.constant dense<0.000000e+00> : vector<2xf32>
      %30 = vector.multi_reduction <add>, %29, %cst_25 [1] : vector<2x128xf32> to vector<2xf32>
      %31 = vector.shape_cast %30 : vector<2xf32> to vector<2x1xf32>
      %cst_26 = arith.constant 1.000000e-24 : f32
      %32 = vector.broadcast %cst_26 : f32 to vector<2x1xf32>
      %33 = arith.maximumf %31, %32 : vector<2x1xf32>
      %34 = math.rsqrt %33 : vector<2x1xf32>
      %35 = arith.mulf %28, %28 : vector<2x128xf32>
      %cst_27 = arith.constant dense<0.000000e+00> : vector<2xf32>
      %36 = vector.multi_reduction <add>, %35, %cst_27 [1] : vector<2x128xf32> to vector<2xf32>
      %37 = vector.shape_cast %36 : vector<2xf32> to vector<2x1xf32>
      %cst_28 = arith.constant 1.000000e-24 : f32
      %38 = vector.broadcast %cst_28 : f32 to vector<2x1xf32>
      %39 = arith.maximumf %37, %38 : vector<2x1xf32>
      %40 = math.rsqrt %39 : vector<2x1xf32>
      %41 = vector.broadcast %34 : vector<2x1xf32> to vector<2x128xf32>
      %42 = arith.mulf %23, %41 : vector<2x128xf32>
      %43 = vector.broadcast %40 : vector<2x1xf32> to vector<2x128xf32>
      %44 = arith.mulf %28, %43 : vector<2x128xf32>
      %45 = arith.subf %42, %44 : vector<2x128xf32>
      %cst_29 = arith.constant 9.99999997E-7 : f32
      %46 = vector.broadcast %cst_29 : f32 to vector<2x128xf32>
      %47 = arith.addf %45, %46 : vector<2x128xf32>
      %48 = arith.mulf %47, %47 : vector<2x128xf32>
      %cst_30 = arith.constant dense<0.000000e+00> : vector<2xf32>
      %49 = vector.multi_reduction <add>, %48, %cst_30 [1] : vector<2x128xf32> to vector<2xf32>
      %50 = vector.shape_cast %49 : vector<2xf32> to vector<2x1xf32>
      %51 = math.sqrt %50 : vector<2x1xf32>
      %c0_31 = arith.constant 0 : index
      %52 = memref.load %arg1[%c0_31] : memref<1xi32, #tpu.memory_space<smem>>
      %53 = arith.sitofp %52 : i32 to f32
      %cst_32 = arith.constant 1.000000e+00 : f32
      %54 = arith.subf %cst_32, %53 : f32
      %55 = vector.broadcast %54 : f32 to vector<2x1xf32>
      %56 = arith.mulf %55, %50 : vector<2x1xf32>
      %cst_33 = arith.constant 2.000000e+00 : f32
      %57 = vector.broadcast %cst_33 : f32 to vector<2x1xf32>
      %58 = arith.subf %57, %51 : vector<2x1xf32>
      %cst_34 = arith.constant 0.000000e+00 : f32
      %59 = vector.broadcast %cst_34 : f32 to vector<2x1xf32>
      %60 = arith.maximumf %58, %59 : vector<2x1xf32>
      %61 = arith.mulf %60, %60 : vector<2x1xf32>
      %62 = vector.broadcast %53 : f32 to vector<2x1xf32>
      %63 = arith.mulf %62, %61 : vector<2x1xf32>
      %64 = arith.addf %56, %63 : vector<2x1xf32>
      %65 = vector.shape_cast %64 : vector<2x1xf32> to vector<1x2x1xf32>
      %cst_35 = arith.constant dense<0.000000e+00> : vector<1xf32>
      %66 = vector.multi_reduction <add>, %65, %cst_35 [1, 2] : vector<1x2x1xf32> to vector<1xf32>
      %67 = vector.shape_cast %66 : vector<1xf32> to vector<1x1x1xf32>
      %68 = vector.extract %67[0, 0, 0] : f32 from vector<1x1x1xf32>
      %69 = vector.broadcast %68 : f32 to vector<1x1xf32>
      %cst_36 = arith.constant 2.000000e+00 : f32
      %70 = vector.broadcast %cst_36 : f32 to vector<1x1xf32>
      %71 = arith.divf %69, %70 : vector<1x1xf32>
      %c0_37 = arith.constant 0 : index
      %c0_38 = arith.constant 0 : index
      %72 = vector.load %arg7[%c0_37, %c0_38] : memref<1x1xf32, #tpu.memory_space<vmem>>, vector<1x1xf32>
      tpu.vector_store %arg7[%c0_37, %c0_38], %71 {strides = array<i32>} : memref<1x1xf32, #tpu.memory_space<vmem>>, vector<1x1xf32>,
    } else {
    }
    return
  }
  func.func @transform_0(%arg0: i32, %arg1: memref<1xi32, #tpu.memory_space<smem>>) -> (i32, i32) {
    %c0_i32 = arith.constant 0 : i32
    %c0_i32_0 = arith.constant 0 : i32
    return %c0_i32, %arg0 : i32, i32
  }
  func.func @transform_1(%arg0: i32, %arg1: memref<1xi32, #tpu.memory_space<smem>>) -> (i32, i32) {
    %c0_i32 = arith.constant 0 : i32
    %c0_i32_0 = arith.constant 0 : i32
    return %c0_i32, %arg0 : i32, i32
  }
  func.func @transform_2(%arg0: i32, %arg1: memref<1xi32, #tpu.memory_space<smem>>) -> (i32, i32) {
    %c0_i32 = arith.constant 0 : i32
    %c0_i32_0 = arith.constant 0 : i32
    return %arg0, %c0_i32 : i32, i32
  }
  func.func @transform_3(%arg0: i32, %arg1: memref<1xi32, #tpu.memory_space<smem>>) -> (i32, i32) {
    %c0_i32 = arith.constant 0 : i32
    %c0_i32_0 = arith.constant 0 : i32
    %c0_i32_1 = arith.constant 0 : i32
    return %c0_i32, %c0_i32_0 : i32, i32
  }
  func.func @transform_4(%arg0: i32, %arg1: memref<1xi32, #tpu.memory_space<smem>>) -> (i32, i32) {
    %c0_i32 = arith.constant 0 : i32
    %c0_i32_0 = arith.constant 0 : i32
    %c0_i32_1 = arith.constant 0 : i32
    return %c0_i32, %c0_i32_0 : i32, i32
  }
  func.func @transform_5(%arg0: i32, %arg1: memref<1xi32, #tpu.memory_space<smem>>) -> (i32, i32) {
    %c0_i32 = arith.constant 0 : i32
    %c0_i32_0 = arith.constant 0 : i32
    %c0_i32_1 = arith.constant 0 : i32
    return %c0_i32, %c0_i32_0 : i32, i32
  }
}

</mosaic_0001>

<llo_original>
// kernel: _fused_loss.1
$region0: #{_fused_loss.1}
  #allocation0 [shape = 'u32[]', space=smem, size = 0x4, offset = 0x4, fixed_abs, tag = 'smem constant byte address 0x4 - core index']
  #allocation1 [shape = 'u32[144,128]{1,0:T(1,128)}', space=vmem, size = 0x12000, scoped, tag = 'internal scratch']
  #allocation2 [shape = 'f32[2,128]{1,0:T(2,128)}', space=vmem, size = 0x400, scoped, tag = 'scratch operand']
  #allocation3 [shape = 'f32[2,128]{1,0:T(2,128)}', space=vmem, size = 0x400, scoped, tag = 'scratch operand']
  #allocation4 [shape = 's32[1]{0}', space=sflag, size = 0x4, scoped, tag = 'scoped memory for _fused_loss.1']
  #allocation5 [shape = 's32[1]{0:T(128)S(6)}', space=smem, size = 0x200, scoped, tag = 'prefetched SMEM operand 0']
  %s0 = inlined_call_operand.<no memory space> [shape: s32[1], index: 0, kind: input, shape index: {}]
  %s1 = inlined_call_operand.vmem [shape: bf16[2,1024], index: 1, kind: input, shape index: {}]
  %s2 = inlined_call_operand.vmem [shape: bf16[2,1024], index: 2, kind: input, shape index: {}]
  %s3 = inlined_call_operand.vmem [shape: bf16[1024,128], index: 3, kind: input, shape index: {}]
  %s4 = inlined_call_operand.vmem [shape: f32[1,128], index: 4, kind: input, shape index: {}]
  %s5 = inlined_call_operand.vmem [shape: f32[1,128], index: 5, kind: input, shape index: {}]
  %s6 = inlined_call_operand.hbm [shape: f32[1,1], index: 6, kind: output, shape index: {}]
  %s7 = sld [smem:[#allocation0]]
  $region38: #{_fused_loss.1} parent=0
    _
  %s9 = ssub.s32 1, %s7
  %s10 = scalar_select 0, %s9, %s7
  %11 = sst [smem:[#allocation5]] %s0
  $region1: #{_fused_loss.1} parent=0
    #allocation6 [shape = 'u8[512]{0}', space=vmem, size = 0x400, scoped, tag = 'output window, operand 0, single buffered']
    #allocation7 [shape = 's32[1]{0}', space=sflag, size = 0x4, scoped, tag = 'scoped memory for _fused_loss.1']
    %12 = vsyncpa [#allocation7], 0
    // Predicated region
    $region2: #{_fused_loss.1} parent=1 // pred_check
      _
    $region3: #{_fused_loss.1} parent=1 // pred_check_branch
      %14 = sbr.rel (0) target = $region5
    $region4: #{_fused_loss.1} parent=1 // pred_region
      _
    $region5: #{_fused_loss.1} parent=1 // pred_fallthru
      _
    // Predicated region
    $region6: #{_fused_loss.1} parent=1 // pred_check
      _
    $region7: #{_fused_loss.1} parent=1 // pred_check_branch
      %16 = sbr.rel (0) target = $region9
    $region8: #{_fused_loss.1} parent=1 // pred_region
      _
    $region9: #{_fused_loss.1} parent=1 // pred_fallthru
      _
    // Predicated region
    $region10: #{_fused_loss.1} parent=1 // pred_check
      _
    $region11: #{_fused_loss.1} parent=1 // pred_check_branch
      %18 = sbr.rel (0) target = $region13
    $region12: #{_fused_loss.1} parent=1 // pred_region
      _
    $region13: #{_fused_loss.1} parent=1 // pred_fallthru
      _
    // Predicated region
    $region14: #{_fused_loss.1} parent=1 // pred_check
      _
    $region15: #{_fused_loss.1} parent=1 // pred_check_branch
      %20 = sbr.rel (0) target = $region17
    $region16: #{_fused_loss.1} parent=1 // pred_region
      _
    $region17: #{_fused_loss.1} parent=1 // pred_fallthru
      _
    // Predicated region
    $region18: #{_fused_loss.1} parent=1 // pred_check
      _
    $region19: #{_fused_loss.1} parent=1 // pred_check_branch
      %22 = sbr.rel (0) target = $region21
    $region20: #{_fused_loss.1} parent=1 // pred_region
      _
    $region21: #{_fused_loss.1} parent=1 // pred_fallthru
      _
    %p24 = scmp.eq.s32.totalorder 0, 0
    // Predicated region
    $region22: #{_fused_loss.1} parent=1 // pred_check
      %p25 = pneg %p24
    $region23: #{_fused_loss.1} parent=1 // pred_check_branch
      %27 = sbr.rel (%p25) target = $region25
    $region24: #{_fused_loss.1} parent=1 // pred_region
      %28 = vst [vmem:[#allocation2] sm:$0x3] 0.0
      %29 = vst [vmem:[#allocation3] sm:$0x3] 0.0
    $region25: #{_fused_loss.1} parent=1 // pred_fallthru
      _
    %v30 = vld [vmem:[%s3] sm:$0xf]
    %v31 = vld [vmem:[%s3 + $0x4] sm:$0xf]
    %v32 = vld [vmem:[%s3 + $0x8] sm:$0xf]
    %v33 = vld [vmem:[%s3 + $0xc] sm:$0xf]
    %v34 = vld [vmem:[%s3 + $0x10] sm:$0xf]
    %v35 = vld [vmem:[%s3 + $0x14] sm:$0xf]
    %v36 = vld [vmem:[%s3 + $0x18] sm:$0xf]
    %v37 = vld [vmem:[%s3 + $0x1c] sm:$0xf]
    %v38 = vld [vmem:[%s3 + $0x20] sm:$0xf]
    %v39 = vld [vmem:[%s3 + $0x24] sm:$0xf]
    %v40 = vld [vmem:[%s3 + $0x28] sm:$0xf]
    %v41 = vld [vmem:[%s3 + $0x2c] sm:$0xf]
    %v42 = vld [vmem:[%s3 + $0x30] sm:$0xf]
    %v43 = vld [vmem:[%s3 + $0x34] sm:$0xf]
    %v44 = vld [vmem:[%s3 + $0x38] sm:$0xf]
    %v45 = vld [vmem:[%s3 + $0x3c] sm:$0xf]
    %v46 = vld [vmem:[%s3 + $0x40] sm:$0xf]
    %v47 = vld [vmem:[%s3 + $0x44] sm:$0xf]
    %v48 = vld [vmem:[%s3 + $0x48] sm:$0xf]
    %v49 = vld [vmem:[%s3 + $0x4c] sm:$0xf]
    %v50 = vld [vmem:[%s3 + $0x50] sm:$0xf]
    %v51 = vld [vmem:[%s3 + $0x54] sm:$0xf]
    %v52 = vld [vmem:[%s3 + $0x58] sm:$0xf]
    %v53 = vld [vmem:[%s3 + $0x5c] sm:$0xf]
    %v54 = vld [vmem:[%s3 + $0x60] sm:$0xf]
    %v55 = vld [vmem:[%s3 + $0x64] sm:$0xf]
    %v56 = vld [vmem:[%s3 + $0x68] sm:$0xf]
    %v57 = vld [vmem:[%s3 + $0x6c] sm:$0xf]
    %v58 = vld [vmem:[%s3 + $0x70] sm:$0xf]
    %v59 = vld [vmem:[%s3 + $0x74] sm:$0xf]
    %v60 = vld [vmem:[%s3 + $0x78] sm:$0xf]
    %v61 = vld [vmem:[%s3 + $0x7c] sm:$0xf]
    %v62 = vld [vmem:[%s3 + $0x80] sm:$0xf]
    %v63 = vld [vmem:[%s3 + $0x84] sm:$0xf]
    %v64 = vld [vmem:[%s3 + $0x88] sm:$0xf]
    %v65 = vld [vmem:[%s3 + $0x8c] sm:$0xf]
    %v66 = vld [vmem:[%s3 + $0x90] sm:$0xf]
    %v67 = vld [vmem:[%s3 + $0x94] sm:$0xf]
    %v68 = vld [vmem:[%s3 + $0x98] sm:$0xf]
    %v69 = vld [vmem:[%s3 + $0x9c] sm:$0xf]
    %v70 = vld [vmem:[%s3 + $0xa0] sm:$0xf]
    %v71 = vld [vmem:[%s3 + $0xa4] sm:$0xf]
    %v72 = vld [vmem:[%s3 + $0xa8] sm:$0xf]
    %v73 = vld [vmem:[%s3 + $0xac] sm:$0xf]
    %v74 = vld [vmem:[%s3 + $0xb0] sm:$0xf]
    %v75 = vld [vmem:[%s3 + $0xb4] sm:$0xf]
    %v76 = vld [vmem:[%s3 + $0xb8] sm:$0xf]
    %v77 = vld [vmem:[%s3 + $0xbc] sm:$0xf]
    %v78 = vld [vmem:[%s3 + $0xc0] sm:$0xf]
    %v79 = vld [vmem:[%s3 + $0xc4] sm:$0xf]
    %v80 = vld [vmem:[%s3 + $0xc8] sm:$0xf]
    %v81 = vld [vmem:[%s3 + $0xcc] sm:$0xf]
    %v82 = vld [vmem:[%s3 + $0xd0] sm:$0xf]
    %v83 = vld [vmem:[%s3 + $0xd4] sm:$0xf]
    %v84 = vld [vmem:[%s3 + $0xd8] sm:$0xf]
    %v85 = vld [vmem:[%s3 + $0xdc] sm:$0xf]
    %v86 = vld [vmem:[%s3 + $0xe0] sm:$0xf]
    %v87 = vld [vmem:[%s3 + $0xe4] sm:$0xf]
    %v88 = vld [vmem:[%s3 + $0xe8] sm:$0xf]
    %v89 = vld [vmem:[%s3 + $0xec] sm:$0xf]
    %v90 = vld [vmem:[%s3 + $0xf0] sm:$0xf]
    %v91 = vld [vmem:[%s3 + $0xf4] sm:$0xf]
    %v92 = vld [vmem:[%s3 + $0xf8] sm:$0xf]
    %v93 = vld [vmem:[%s3 + $0xfc] sm:$0xf]
    %v94 = vld [vmem:[%s3 + $0x100] sm:$0xf]
    %v95 = vld [vmem:[%s3 + $0x104] sm:$0xf]
    %v96 = vld [vmem:[%s3 + $0x108] sm:$0xf]
    %v97 = vld [vmem:[%s3 + $0x10c] sm:$0xf]
    %v98 = vld [vmem:[%s3 + $0x110] sm:$0xf]
    %v99 = vld [vmem:[%s3 + $0x114] sm:$0xf]
    %v100 = vld [vmem:[%s3 + $0x118] sm:$0xf]
    %v101 = vld [vmem:[%s3 + $0x11c] sm:$0xf]
    %v102 = vld [vmem:[%s3 + $0x120] sm:$0xf]
    %v103 = vld [vmem:[%s3 + $0x124] sm:$0xf]
    %v104 = vld [vmem:[%s3 + $0x128] sm:$0xf]
    %v105 = vld [vmem:[%s3 + $0x12c] sm:$0xf]
    %v106 = vld [vmem:[%s3 + $0x130] sm:$0xf]
    %v107 = vld [vmem:[%s3 + $0x134] sm:$0xf]
    %v108 = vld [vmem:[%s3 + $0x138] sm:$0xf]
    %v109 = vld [vmem:[%s3 + $0x13c] sm:$0xf]
    %v110 = vld [vmem:[%s3 + $0x140] sm:$0xf]
    %v111 = vld [vmem:[%s3 + $0x144] sm:$0xf]
    %v112 = vld [vmem:[%s3 + $0x148] sm:$0xf]
    %v113 = vld [vmem:[%s3 + $0x14c] sm:$0xf]
    %v114 = vld [vmem:[%s3 + $0x150] sm:$0xf]
    %v115 = vld [vmem:[%s3 + $0x154] sm:$0xf]
    %v116 = vld [vmem:[%s3 + $0x158] sm:$0xf]
    %v117 = vld [vmem:[%s3 + $0x15c] sm:$0xf]
    %v118 = vld [vmem:[%s3 + $0x160] sm:$0xf]
    %v119 = vld [vmem:[%s3 + $0x164] sm:$0xf]
    %v120 = vld [vmem:[%s3 + $0x168] sm:$0xf]
    %v121 = vld [vmem:[%s3 + $0x16c] sm:$0xf]
    %v122 = vld [vmem:[%s3 + $0x170] sm:$0xf]
    %v123 = vld [vmem:[%s3 + $0x174] sm:$0xf]
    %v124 = vld [vmem:[%s3 + $0x178] sm:$0xf]
    %v125 = vld [vmem:[%s3 + $0x17c] sm:$0xf]
    %v126 = vld [vmem:[%s3 + $0x180] sm:$0xf]
    %v127 = vld [vmem:[%s3 + $0x184] sm:$0xf]
    %v128 = vld [vmem:[%s3 + $0x188] sm:$0xf]
    %v129 = vld [vmem:[%s3 + $0x18c] sm:$0xf]
    %v130 = vld [vmem:[%s3 + $0x190] sm:$0xf]
    %v131 = vld [vmem:[%s3 + $0x194] sm:$0xf]
    %v132 = vld [vmem:[%s3 + $0x198] sm:$0xf]
    %v133 = vld [vmem:[%s3 + $0x19c] sm:$0xf]
    %v134 = vld [vmem:[%s3 + $0x1a0] sm:$0xf]
    %v135 = vld [vmem:[%s3 + $0x1a4] sm:$0xf]
    %v136 = vld [vmem:[%s3 + $0x1a8] sm:$0xf]
    %v137 = vld [vmem:[%s3 + $0x1ac] sm:$0xf]
    %v138 = vld [vmem:[%s3 + $0x1b0] sm:$0xf]
    %v139 = vld [vmem:[%s3 + $0x1b4] sm:$0xf]
    %v140 = vld [vmem:[%s3 + $0x1b8] sm:$0xf]
    %v141 = vld [vmem:[%s3 + $0x1bc] sm:$0xf]
    %v142 = vld [vmem:[%s3 + $0x1c0] sm:$0xf]
    %v143 = vld [vmem:[%s3 + $0x1c4] sm:$0xf]
    %v144 = vld [vmem:[%s3 + $0x1c8] sm:$0xf]
    %v145 = vld [vmem:[%s3 + $0x1cc] sm:$0xf]
    %v146 = vld [vmem:[%s3 + $0x1d0] sm:$0xf]
    %v147 = vld [vmem:[%s3 + $0x1d4] sm:$0xf]
    %v148 = vld [vmem:[%s3 + $0x1d8] sm:$0xf]
    %v149 = vld [vmem:[%s3 + $0x1dc] sm:$0xf]
    %v150 = vld [vmem:[%s3 + $0x1e0] sm:$0xf]
    %v151 = vld [vmem:[%s3 + $0x1e4] sm:$0xf]
    %v152 = vld [vmem:[%s3 + $0x1e8] sm:$0xf]
    %v153 = vld [vmem:[%s3 + $0x1ec] sm:$0xf]
    %v154 = vld [vmem:[%s3 + $0x1f0] sm:$0xf]
    %v155 = vld [vmem:[%s3 + $0x1f4] sm:$0xf]
    %v156 = vld [vmem:[%s3 + $0x1f8] sm:$0xf]
    %v157 = vld [vmem:[%s3 + $0x1fc] sm:$0xf]
    %v158 = vld [vmem:[#allocation2] sm:$0x3]
    %v159 = vld [vmem:[%s1] sm:$0xff]
    %v161 = vcombine.high %v159, %v159
    %v163 = vunpack.c.l.s4 1966171168
    %v164 = vunpack.c.0.s8 %v163
    %v165 = vlaneseq
    %v166 = vshrl.u32 %v165, 7
    %v167 = vsub.s32 %v164, %v166
    %v168 = vrot.slane %v159, %v167
    %v170 = vunpack.c.l.s4 1966171168
    %v171 = vunpack.c.0.s8 %v170
    %v172 = vlaneseq
    %v173 = vshrl.u32 %v172, 7
    %v174 = vsub.s32 %v171, %v173
    %v175 = vrot.slane %v161, %v174
    %v176 = vcombine.high %v168, %v168
    %v177 = vcombine.high %v175, %v175
    %v179 = vunpack.c.l.s4 1966171168
    %v180 = vunpack.c.0.s8 %v179
    %v181 = vlaneseq
    %v182 = vshrl.u32 %v181, 7
    %v183 = vsub.s32 %v180, %v182
    %v184 = vrot.slane %v168, %v183
    %v186 = vunpack.c.l.s4 1966171168
    %v187 = vunpack.c.0.s8 %v186
    %v188 = vlaneseq
    %v189 = vshrl.u32 %v188, 7
    %v190 = vsub.s32 %v187, %v189
    %v191 = vrot.slane %v175, %v190
    %v193 = vunpack.c.l.s4 1966171168
    %v194 = vunpack.c.0.s8 %v193
    %v195 = vlaneseq
    %v196 = vshrl.u32 %v195, 7
    %v197 = vsub.s32 %v194, %v196
    %v198 = vrot.slane %v176, %v197
    %v200 = vunpack.c.l.s4 1966171168
    %v201 = vunpack.c.0.s8 %v200
    %v202 = vlaneseq
    %v203 = vshrl.u32 %v202, 7
    %v204 = vsub.s32 %v201, %v203
    %v205 = vrot.slane %v177, %v204
    %v206 = vcombine.high %v184, %v184
    %v207 = vcombine.high %v191, %v191
    %v208 = vcombine.high %v198, %v198
    %v209 = vcombine.high %v205, %v205
    %v346 = vunpack.c.l.b16 %v30
    %v347 = vunpack.c.l.b16 %v31
    %v348 = vunpack.c.l.b16 %v32
    %v349 = vunpack.c.l.b16 %v33
    %v350 = vunpack.c.l.b16 %v34
    %v351 = vunpack.c.l.b16 %v35
    %v352 = vunpack.c.l.b16 %v36
    %v353 = vunpack.c.l.b16 %v37
    %v354 = vunpack.c.l.b16 %v38
    %v355 = vunpack.c.l.b16 %v39
    %v356 = vunpack.c.l.b16 %v40
    %v357 = vunpack.c.l.b16 %v41
    %v358 = vunpack.c.l.b16 %v42
    %v359 = vunpack.c.l.b16 %v43
    %v360 = vunpack.c.l.b16 %v44
    %v361 = vunpack.c.l.b16 %v45
    %v362 = vunpack.c.l.b16 %v46
    %v363 = vunpack.c.l.b16 %v47
    %v364 = vunpack.c.l.b16 %v48
    %v365 = vunpack.c.l.b16 %v49
    %v366 = vunpack.c.l.b16 %v50
    %v367 = vunpack.c.l.b16 %v51
    %v368 = vunpack.c.l.b16 %v52
    %v369 = vunpack.c.l.b16 %v53
    %v370 = vunpack.c.l.b16 %v54
    %v371 = vunpack.c.l.b16 %v55
    %v372 = vunpack.c.l.b16 %v56
    %v373 = vunpack.c.l.b16 %v57
    %v374 = vunpack.c.l.b16 %v58
    %v375 = vunpack.c.l.b16 %v59
    %v376 = vunpack.c.l.b16 %v60
    %v377 = vunpack.c.l.b16 %v61
    %v378 = vunpack.c.l.b16 %v62
    %v379 = vunpack.c.l.b16 %v63
    %v380 = vunpack.c.l.b16 %v64
    %v381 = vunpack.c.l.b16 %v65
    %v382 = vunpack.c.l.b16 %v66
    %v383 = vunpack.c.l.b16 %v67
    %v384 = vunpack.c.l.b16 %v68
    %v385 = vunpack.c.l.b16 %v69
    %v386 = vunpack.c.l.b16 %v70
    %v387 = vunpack.c.l.b16 %v71
    %v388 = vunpack.c.l.b16 %v72
    %v389 = vunpack.c.l.b16 %v73
    %v390 = vunpack.c.l.b16 %v74
    %v391 = vunpack.c.l.b16 %v75
    %v392 = vunpack.c.l.b16 %v76
    %v393 = vunpack.c.l.b16 %v77
    %v394 = vunpack.c.l.b16 %v78
    %v395 = vunpack.c.l.b16 %v79
    %v396 = vunpack.c.l.b16 %v80
    %v397 = vunpack.c.l.b16 %v81
    %v398 = vunpack.c.l.b16 %v82
    %v399 = vunpack.c.l.b16 %v83
    %v400 = vunpack.c.l.b16 %v84
    %v401 = vunpack.c.l.b16 %v85
    %v402 = vunpack.c.l.b16 %v86
    %v403 = vunpack.c.l.b16 %v87
    %v404 = vunpack.c.l.b16 %v88
    %v405 = vunpack.c.l.b16 %v89
    %v406 = vunpack.c.l.b16 %v90
    %v407 = vunpack.c.l.b16 %v91
    %v408 = vunpack.c.l.b16 %v92
    %v409 = vunpack.c.l.b16 %v93
    %v410 = vunpack.c.l.b16 %v94
    %v411 = vunpack.c.l.b16 %v95
    %v412 = vunpack.c.l.b16 %v96
    %v413 = vunpack.c.l.b16 %v97
    %v414 = vunpack.c.l.b16 %v98
    %v415 = vunpack.c.l.b16 %v99
    %v416 = vunpack.c.l.b16 %v100
    %v417 = vunpack.c.l.b16 %v101
    %v418 = vunpack.c.l.b16 %v102
    %v419 = vunpack.c.l.b16 %v103
    %v420 = vunpack.c.l.b16 %v104
    %v421 = vunpack.c.l.b16 %v105
    %v422 = vunpack.c.l.b16 %v106
    %v423 = vunpack.c.l.b16 %v107
    %v424 = vunpack.c.l.b16 %v108
    %v425 = vunpack.c.l.b16 %v109
    %v426 = vunpack.c.l.b16 %v110
    %v427 = vunpack.c.l.b16 %v111
    %v428 = vunpack.c.l.b16 %v112
    %v429 = vunpack.c.l.b16 %v113
    %v430 = vunpack.c.l.b16 %v114
    %v431 = vunpack.c.l.b16 %v115
    %v432 = vunpack.c.l.b16 %v116
    %v433 = vunpack.c.l.b16 %v117
    %v434 = vunpack.c.l.b16 %v118
    %v435 = vunpack.c.l.b16 %v119
    %v436 = vunpack.c.l.b16 %v120
    %v437 = vunpack.c.l.b16 %v121
    %v438 = vunpack.c.l.b16 %v122
    %v439 = vunpack.c.l.b16 %v123
    %v440 = vunpack.c.l.b16 %v124
    %v441 = vunpack.c.l.b16 %v125
    %v442 = vunpack.c.l.b16 %v126
    %v443 = vunpack.c.l.b16 %v127
    %v444 = vunpack.c.l.b16 %v128
    %v445 = vunpack.c.l.b16 %v129
    %v446 = vunpack.c.l.b16 %v130
    %v447 = vunpack.c.l.b16 %v131
    %v448 = vunpack.c.l.b16 %v132
    %v449 = vunpack.c.l.b16 %v133
    %v450 = vunpack.c.l.b16 %v134
    %v451 = vunpack.c.l.b16 %v135
    %v452 = vunpack.c.l.b16 %v136
    %v453 = vunpack.c.l.b16 %v137
    %v454 = vunpack.c.l.b16 %v138
    %v455 = vunpack.c.l.b16 %v139
    %v456 = vunpack.c.l.b16 %v140
    %v457 = vunpack.c.l.b16 %v141
    %v458 = vunpack.c.l.b16 %v142
    %v459 = vunpack.c.l.b16 %v143
    %v460 = vunpack.c.l.b16 %v144
    %v461 = vunpack.c.l.b16 %v145
    %v462 = vunpack.c.l.b16 %v146
    %v463 = vunpack.c.l.b16 %v147
    %v464 = vunpack.c.l.b16 %v148
    %v465 = vunpack.c.l.b16 %v149
    %v466 = vunpack.c.l.b16 %v150
    %v467 = vunpack.c.l.b16 %v151
    %v468 = vunpack.c.l.b16 %v152
    %v469 = vunpack.c.l.b16 %v153
    %v470 = vunpack.c.l.b16 %v154
    %v471 = vunpack.c.l.b16 %v155
    %v472 = vunpack.c.l.b16 %v156
    %v473 = vunpack.c.l.b16 %v157
    %v474 = vpack.c.b16 %v347, %v346
    %v475 = vpack.c.b16 %v349, %v348
    %v476 = vpack.c.b16 %v351, %v350
    %v477 = vpack.c.b16 %v353, %v352
    %v478 = vpack.c.b16 %v355, %v354
    %v479 = vpack.c.b16 %v357, %v356
    %v480 = vpack.c.b16 %v359, %v358
    %v481 = vpack.c.b16 %v361, %v360
    %v482 = vpack.c.b16 %v363, %v362
    %v483 = vpack.c.b16 %v365, %v364
    %v484 = vpack.c.b16 %v367, %v366
    %v485 = vpack.c.b16 %v369, %v368
    %v486 = vpack.c.b16 %v371, %v370
    %v487 = vpack.c.b16 %v373, %v372
    %v488 = vpack.c.b16 %v375, %v374
    %v489 = vpack.c.b16 %v377, %v376
    %v490 = vpack.c.b16 %v379, %v378
    %v491 = vpack.c.b16 %v381, %v380
    %v492 = vpack.c.b16 %v383, %v382
    %v493 = vpack.c.b16 %v385, %v384
    %v494 = vpack.c.b16 %v387, %v386
    %v495 = vpack.c.b16 %v389, %v388
    %v496 = vpack.c.b16 %v391, %v390
    %v497 = vpack.c.b16 %v393, %v392
    %v498 = vpack.c.b16 %v395, %v394
    %v499 = vpack.c.b16 %v397, %v396
    %v500 = vpack.c.b16 %v399, %v398
    %v501 = vpack.c.b16 %v401, %v400
    %v502 = vpack.c.b16 %v403, %v402
    %v503 = vpack.c.b16 %v405, %v404
    %v504 = vpack.c.b16 %v407, %v406
    %v505 = vpack.c.b16 %v409, %v408
    %v506 = vpack.c.b16 %v411, %v410
    %v507 = vpack.c.b16 %v413, %v412
    %v508 = vpack.c.b16 %v415, %v414
    %v509 = vpack.c.b16 %v417, %v416
    %v510 = vpack.c.b16 %v419, %v418
    %v511 = vpack.c.b16 %v421, %v420
    %v512 = vpack.c.b16 %v423, %v422
    %v513 = vpack.c.b16 %v425, %v424
    %v514 = vpack.c.b16 %v427, %v426
    %v515 = vpack.c.b16 %v429, %v428
    %v516 = vpack.c.b16 %v431, %v430
    %v517 = vpack.c.b16 %v433, %v432
    %v518 = vpack.c.b16 %v435, %v434
    %v519 = vpack.c.b16 %v437, %v436
    %v520 = vpack.c.b16 %v439, %v438
    %v521 = vpack.c.b16 %v441, %v440
    %v522 = vpack.c.b16 %v443, %v442
    %v523 = vpack.c.b16 %v445, %v444
    %v524 = vpack.c.b16 %v447, %v446
    %v525 = vpack.c.b16 %v449, %v448
    %v526 = vpack.c.b16 %v451, %v450
    %v527 = vpack.c.b16 %v453, %v452
    %v528 = vpack.c.b16 %v455, %v454
    %v529 = vpack.c.b16 %v457, %v456
    %v530 = vpack.c.b16 %v459, %v458
    %v531 = vpack.c.b16 %v461, %v460
    %v532 = vpack.c.b16 %v463, %v462
    %v533 = vpack.c.b16 %v465, %v464
    %v534 = vpack.c.b16 %v467, %v466
    %v535 = vpack.c.b16 %v469, %v468
    %v536 = vpack.c.b16 %v471, %v470
    %v537 = vpack.c.b16 %v473, %v472
    %602 = vmatprep.subr.bf16.mxu0 0
    %603 = vmatpush1.bf16.msra.mxu0 %v481
    %604 = vmatprep.subr.bf16.mxu0 0
    %605 = vmatpush1.bf16.msra.mxu0 %v480
    %606 = vmatprep.subr.bf16.mxu0 0
    %607 = vmatpush1.bf16.msra.mxu0 %v479
    %608 = vmatprep.subr.bf16.mxu0 0
    %609 = vmatpush1.bf16.msra.mxu0 %v478
    %610 = vmatprep.subr.bf16.mxu0 0
    %611 = vmatpush1.bf16.msra.mxu0 %v477
    %612 = vmatprep.subr.bf16.mxu0 0
    %613 = vmatpush1.bf16.msra.mxu0 %v476
    %614 = vmatprep.subr.bf16.mxu0 0
    %615 = vmatpush1.bf16.msra.mxu0 %v475
    %616 = vmatprep.subr.bf16.mxu0 0
    %617 = vmatpush1.bf16.msra.mxu0 %v474
    %618 = vmatprep.subr.bf16.mxu0 0
    %619 = vmatpush2.bf16.msra.mxu0 %v489
    %620 = vmatprep.subr.bf16.mxu0 0
    %621 = vmatpush2.bf16.msra.mxu0 %v488
    %622 = vmatprep.subr.bf16.mxu0 0
    %623 = vmatpush2.bf16.msra.mxu0 %v487
    %624 = vmatprep.subr.bf16.mxu0 0
    %625 = vmatpush2.bf16.msra.mxu0 %v486
    %626 = vmatprep.subr.bf16.mxu0 0
    %627 = vmatpush2.bf16.msra.mxu0 %v485
    %628 = vmatprep.subr.bf16.mxu0 0
    %629 = vmatpush2.bf16.msra.mxu0 %v484
    %630 = vmatprep.subr.bf16.mxu0 0
    %631 = vmatpush2.bf16.msra.mxu0 %v483
    %632 = vmatprep.subr.bf16.mxu0 0
    %633 = vmatpush2.bf16.msra.mxu0 %v482
    %634 = vmatprep.mubr.bf16.mxu0 %v198
    %635 = vmatmul.mubr.bf16.gmra.mxu0 %v184
    %v636 = vpop.f32.mrf.mxu0
    %v637 = vadd.f32 0.0, %v636
    %v638 = vpop.f32.mrf.mxu0
    %v639 = vpop.f32.mrf.mxu0
    %v640 = vpop.f32.mrf.mxu0
    %641 = vdwg.mxu0
    %642 = vmatprep.subr.bf16.mxu0 0
    %643 = vmatpush1.bf16.msra.mxu0 %v497
    %644 = vmatprep.subr.bf16.mxu0 0
    %645 = vmatpush1.bf16.msra.mxu0 %v496
    %646 = vmatprep.subr.bf16.mxu0 0
    %647 = vmatpush1.bf16.msra.mxu0 %v495
    %648 = vmatprep.subr.bf16.mxu0 0
    %649 = vmatpush1.bf16.msra.mxu0 %v494
    %650 = vmatprep.subr.bf16.mxu0 0
    %651 = vmatpush1.bf16.msra.mxu0 %v493
    %652 = vmatprep.subr.bf16.mxu0 0
    %653 = vmatpush1.bf16.msra.mxu0 %v492
    %654 = vmatprep.subr.bf16.mxu0 0
    %655 = vmatpush1.bf16.msra.mxu0 %v491
    %656 = vmatprep.subr.bf16.mxu0 0
    %657 = vmatpush1.bf16.msra.mxu0 %v490
    %658 = vmatprep.subr.bf16.mxu0 0
    %659 = vmatpush2.bf16.msra.mxu0 %v505
    %660 = vmatprep.subr.bf16.mxu0 0
    %661 = vmatpush2.bf16.msra.mxu0 %v504
    %662 = vmatprep.subr.bf16.mxu0 0
    %663 = vmatpush2.bf16.msra.mxu0 %v503
    %664 = vmatprep.subr.bf16.mxu0 0
    %665 = vmatpush2.bf16.msra.mxu0 %v502
    %666 = vmatprep.subr.bf16.mxu0 0
    %667 = vmatpush2.bf16.msra.mxu0 %v501
    %668 = vmatprep.subr.bf16.mxu0 0
    %669 = vmatpush2.bf16.msra.mxu0 %v500
    %670 = vmatprep.subr.bf16.mxu0 0
    %671 = vmatpush2.bf16.msra.mxu0 %v499
    %672 = vmatprep.subr.bf16.mxu0 0
    %673 = vmatpush2.bf16.msra.mxu0 %v498
    %674 = vmatprep.mubr.bf16.mxu0 %v208
    %675 = vmatmul.mubr.bf16.gmra.mxu0 %v206
    %v676 = vpop.f32.mrf.mxu0
    %v677 = vadd.f32 %v637, %v676
    %v678 = vpop.f32.mrf.mxu0
    %v679 = vpop.f32.mrf.mxu0
    %v680 = vpop.f32.mrf.mxu0
    %681 = vdwg.mxu0
    %682 = vmatprep.subr.bf16.mxu0 0
    %683 = vmatpush1.bf16.msra.mxu0 %v513
    %684 = vmatprep.subr.bf16.mxu0 0
    %685 = vmatpush1.bf16.msra.mxu0 %v512
    %686 = vmatprep.subr.bf16.mxu0 0
    %687 = vmatpush1.bf16.msra.mxu0 %v511
    %688 = vmatprep.subr.bf16.mxu0 0
    %689 = vmatpush1.bf16.msra.mxu0 %v510
    %690 = vmatprep.subr.bf16.mxu0 0
    %691 = vmatpush1.bf16.msra.mxu0 %v509
    %692 = vmatprep.subr.bf16.mxu0 0
    %693 = vmatpush1.bf16.msra.mxu0 %v508
    %694 = vmatprep.subr.bf16.mxu0 0
    %695 = vmatpush1.bf16.msra.mxu0 %v507
    %696 = vmatprep.subr.bf16.mxu0 0
    %697 = vmatpush1.bf16.msra.mxu0 %v506
    %698 = vmatprep.subr.bf16.mxu0 0
    %699 = vmatpush2.bf16.msra.mxu0 %v521
    %700 = vmatprep.subr.bf16.mxu0 0
    %701 = vmatpush2.bf16.msra.mxu0 %v520
    %702 = vmatprep.subr.bf16.mxu0 0
    %703 = vmatpush2.bf16.msra.mxu0 %v519
    %704 = vmatprep.subr.bf16.mxu0 0
    %705 = vmatpush2.bf16.msra.mxu0 %v518
    %706 = vmatprep.subr.bf16.mxu0 0
    %707 = vmatpush2.bf16.msra.mxu0 %v517
    %708 = vmatprep.subr.bf16.mxu0 0
    %709 = vmatpush2.bf16.msra.mxu0 %v516
    %710 = vmatprep.subr.bf16.mxu0 0
    %711 = vmatpush2.bf16.msra.mxu0 %v515
    %712 = vmatprep.subr.bf16.mxu0 0
    %713 = vmatpush2.bf16.msra.mxu0 %v514
    %714 = vmatprep.mubr.bf16.mxu0 %v205
    %715 = vmatmul.mubr.bf16.gmra.mxu0 %v191
    %v716 = vpop.f32.mrf.mxu0
    %v717 = vadd.f32 %v677, %v716
    %v718 = vpop.f32.mrf.mxu0
    %v719 = vpop.f32.mrf.mxu0
    %v720 = vpop.f32.mrf.mxu0
    %721 = vdwg.mxu0
    %722 = vmatprep.subr.bf16.mxu0 0
    %723 = vmatpush1.bf16.msra.mxu0 %v529
    %724 = vmatprep.subr.bf16.mxu0 0
    %725 = vmatpush1.bf16.msra.mxu0 %v528
    %726 = vmatprep.subr.bf16.mxu0 0
    %727 = vmatpush1.bf16.msra.mxu0 %v527
    %728 = vmatprep.subr.bf16.mxu0 0
    %729 = vmatpush1.bf16.msra.mxu0 %v526
    %730 = vmatprep.subr.bf16.mxu0 0
    %731 = vmatpush1.bf16.msra.mxu0 %v525
    %732 = vmatprep.subr.bf16.mxu0 0
    %733 = vmatpush1.bf16.msra.mxu0 %v524
    %734 = vmatprep.subr.bf16.mxu0 0
    %735 = vmatpush1.bf16.msra.mxu0 %v523
    %736 = vmatprep.subr.bf16.mxu0 0
    %737 = vmatpush1.bf16.msra.mxu0 %v522
    %738 = vmatprep.subr.bf16.mxu0 0
    %739 = vmatpush2.bf16.msra.mxu0 %v537
    %740 = vmatprep.subr.bf16.mxu0 0
    %741 = vmatpush2.bf16.msra.mxu0 %v536
    %742 = vmatprep.subr.bf16.mxu0 0
    %743 = vmatpush2.bf16.msra.mxu0 %v535
    %744 = vmatprep.subr.bf16.mxu0 0
    %745 = vmatpush2.bf16.msra.mxu0 %v534
    %746 = vmatprep.subr.bf16.mxu0 0
    %747 = vmatpush2.bf16.msra.mxu0 %v533
    %748 = vmatprep.subr.bf16.mxu0 0
    %749 = vmatpush2.bf16.msra.mxu0 %v532
    %750 = vmatprep.subr.bf16.mxu0 0
    %751 = vmatpush2.bf16.msra.mxu0 %v531
    %752 = vmatprep.subr.bf16.mxu0 0
    %753 = vmatpush2.bf16.msra.mxu0 %v530
    %754 = vmatprep.mubr.bf16.mxu0 %v209
    %755 = vmatmul.mubr.bf16.gmra.mxu0 %v207
    %v756 = vpop.f32.mrf.mxu0
    %v757 = vadd.f32 %v717, %v756
    %v758 = vpop.f32.mrf.mxu0
    %v759 = vpop.f32.mrf.mxu0
    %v760 = vpop.f32.mrf.mxu0
    %761 = vdwg.mxu0
    %v762 = vadd.f32 %v158, %v757
    %763 = vst [vmem:[#allocation2] sm:$0x3] %v762
    %v764 = vld [vmem:[#allocation3] sm:$0x3]
    %v765 = vld [vmem:[%s2] sm:$0xff]
    %v767 = vcombine.high %v765, %v765
    %v769 = vunpack.c.l.s4 1966171168
    %v770 = vunpack.c.0.s8 %v769
    %v771 = vlaneseq
    %v772 = vshrl.u32 %v771, 7
    %v773 = vsub.s32 %v770, %v772
    %v774 = vrot.slane %v765, %v773
    %v776 = vunpack.c.l.s4 1966171168
    %v777 = vunpack.c.0.s8 %v776
    %v778 = vlaneseq
    %v779 = vshrl.u32 %v778, 7
    %v780 = vsub.s32 %v777, %v779
    %v781 = vrot.slane %v767, %v780
    %v782 = vcombine.high %v774, %v774
    %v783 = vcombine.high %v781, %v781
    %v785 = vunpack.c.l.s4 1966171168
    %v786 = vunpack.c.0.s8 %v785
    %v787 = vlaneseq
    %v788 = vshrl.u32 %v787, 7
    %v789 = vsub.s32 %v786, %v788
    %v790 = vrot.slane %v774, %v789
    %v792 = vunpack.c.l.s4 1966171168
    %v793 = vunpack.c.0.s8 %v792
    %v794 = vlaneseq
    %v795 = vshrl.u32 %v794, 7
    %v796 = vsub.s32 %v793, %v795
    %v797 = vrot.slane %v781, %v796
    %v799 = vunpack.c.l.s4 1966171168
    %v800 = vunpack.c.0.s8 %v799
    %v801 = vlaneseq
    %v802 = vshrl.u32 %v801, 7
    %v803 = vsub.s32 %v800, %v802
    %v804 = vrot.slane %v782, %v803
    %v806 = vunpack.c.l.s4 1966171168
    %v807 = vunpack.c.0.s8 %v806
    %v808 = vlaneseq
    %v809 = vshrl.u32 %v808, 7
    %v810 = vsub.s32 %v807, %v809
    %v811 = vrot.slane %v783, %v810
    %v812 = vcombine.high %v790, %v790
    %v813 = vcombine.high %v797, %v797
    %v814 = vcombine.high %v804, %v804
    %v815 = vcombine.high %v811, %v811
    %824 = vmatprep.subr.bf16.mxu0 0
    %825 = vmatpush1.bf16.msra.mxu0 %v481
    %826 = vmatprep.subr.bf16.mxu0 0
    %827 = vmatpush1.bf16.msra.mxu0 %v480
    %828 = vmatprep.subr.bf16.mxu0 0
    %829 = vmatpush1.bf16.msra.mxu0 %v479
    %830 = vmatprep.subr.bf16.mxu0 0
    %831 = vmatpush1.bf16.msra.mxu0 %v478
    %832 = vmatprep.subr.bf16.mxu0 0
    %833 = vmatpush1.bf16.msra.mxu0 %v477
    %834 = vmatprep.subr.bf16.mxu0 0
    %835 = vmatpush1.bf16.msra.mxu0 %v476
    %836 = vmatprep.subr.bf16.mxu0 0
    %837 = vmatpush1.bf16.msra.mxu0 %v475
    %838 = vmatprep.subr.bf16.mxu0 0
    %839 = vmatpush1.bf16.msra.mxu0 %v474
    %840 = vmatprep.subr.bf16.mxu0 0
    %841 = vmatpush2.bf16.msra.mxu0 %v489
    %842 = vmatprep.subr.bf16.mxu0 0
    %843 = vmatpush2.bf16.msra.mxu0 %v488
    %844 = vmatprep.subr.bf16.mxu0 0
    %845 = vmatpush2.bf16.msra.mxu0 %v487
    %846 = vmatprep.subr.bf16.mxu0 0
    %847 = vmatpush2.bf16.msra.mxu0 %v486
    %848 = vmatprep.subr.bf16.mxu0 0
    %849 = vmatpush2.bf16.msra.mxu0 %v485
    %850 = vmatprep.subr.bf16.mxu0 0
    %851 = vmatpush2.bf16.msra.mxu0 %v484
    %852 = vmatprep.subr.bf16.mxu0 0
    %853 = vmatpush2.bf16.msra.mxu0 %v483
    %854 = vmatprep.subr.bf16.mxu0 0
    %855 = vmatpush2.bf16.msra.mxu0 %v482
    %856 = vmatprep.mubr.bf16.mxu0 %v804
    %857 = vmatmul.mubr.bf16.gmra.mxu0 %v790
    %v858 = vpop.f32.mrf.mxu0
    %v859 = vadd.f32 0.0, %v858
    %v860 = vpop.f32.mrf.mxu0
    %v861 = vpop.f32.mrf.mxu0
    %v862 = vpop.f32.mrf.mxu0
    %863 = vdwg.mxu0
    %864 = vmatprep.subr.bf16.mxu0 0
    %865 = vmatpush1.bf16.msra.mxu0 %v497
    %866 = vmatprep.subr.bf16.mxu0 0
    %867 = vmatpush1.bf16.msra.mxu0 %v496
    %868 = vmatprep.subr.bf16.mxu0 0
    %869 = vmatpush1.bf16.msra.mxu0 %v495
    %870 = vmatprep.subr.bf16.mxu0 0
    %871 = vmatpush1.bf16.msra.mxu0 %v494
    %872 = vmatprep.subr.bf16.mxu0 0
    %873 = vmatpush1.bf16.msra.mxu0 %v493
    %874 = vmatprep.subr.bf16.mxu0 0
    %875 = vmatpush1.bf16.msra.mxu0 %v492
    %876 = vmatprep.subr.bf16.mxu0 0
    %877 = vmatpush1.bf16.msra.mxu0 %v491
    %878 = vmatprep.subr.bf16.mxu0 0
    %879 = vmatpush1.bf16.msra.mxu0 %v490
    %880 = vmatprep.subr.bf16.mxu0 0
    %881 = vmatpush2.bf16.msra.mxu0 %v505
    %882 = vmatprep.subr.bf16.mxu0 0
    %883 = vmatpush2.bf16.msra.mxu0 %v504
    %884 = vmatprep.subr.bf16.mxu0 0
    %885 = vmatpush2.bf16.msra.mxu0 %v503
    %886 = vmatprep.subr.bf16.mxu0 0
    %887 = vmatpush2.bf16.msra.mxu0 %v502
    %888 = vmatprep.subr.bf16.mxu0 0
    %889 = vmatpush2.bf16.msra.mxu0 %v501
    %890 = vmatprep.subr.bf16.mxu0 0
    %891 = vmatpush2.bf16.msra.mxu0 %v500
    %892 = vmatprep.subr.bf16.mxu0 0
    %893 = vmatpush2.bf16.msra.mxu0 %v499
    %894 = vmatprep.subr.bf16.mxu0 0
    %895 = vmatpush2.bf16.msra.mxu0 %v498
    %896 = vmatprep.mubr.bf16.mxu0 %v814
    %897 = vmatmul.mubr.bf16.gmra.mxu0 %v812
    %v898 = vpop.f32.mrf.mxu0
    %v899 = vadd.f32 %v859, %v898
    %v900 = vpop.f32.mrf.mxu0
    %v901 = vpop.f32.mrf.mxu0
    %v902 = vpop.f32.mrf.mxu0
    %903 = vdwg.mxu0
    %904 = vmatprep.subr.bf16.mxu0 0
    %905 = vmatpush1.bf16.msra.mxu0 %v513
    %906 = vmatprep.subr.bf16.mxu0 0
    %907 = vmatpush1.bf16.msra.mxu0 %v512
    %908 = vmatprep.subr.bf16.mxu0 0
    %909 = vmatpush1.bf16.msra.mxu0 %v511
    %910 = vmatprep.subr.bf16.mxu0 0
    %911 = vmatpush1.bf16.msra.mxu0 %v510
    %912 = vmatprep.subr.bf16.mxu0 0
    %913 = vmatpush1.bf16.msra.mxu0 %v509
    %914 = vmatprep.subr.bf16.mxu0 0
    %915 = vmatpush1.bf16.msra.mxu0 %v508
    %916 = vmatprep.subr.bf16.mxu0 0
    %917 = vmatpush1.bf16.msra.mxu0 %v507
    %918 = vmatprep.subr.bf16.mxu0 0
    %919 = vmatpush1.bf16.msra.mxu0 %v506
    %920 = vmatprep.subr.bf16.mxu0 0
    %921 = vmatpush2.bf16.msra.mxu0 %v521
    %922 = vmatprep.subr.bf16.mxu0 0
    %923 = vmatpush2.bf16.msra.mxu0 %v520
    %924 = vmatprep.subr.bf16.mxu0 0
    %925 = vmatpush2.bf16.msra.mxu0 %v519
    %926 = vmatprep.subr.bf16.mxu0 0
    %927 = vmatpush2.bf16.msra.mxu0 %v518
    %928 = vmatprep.subr.bf16.mxu0 0
    %929 = vmatpush2.bf16.msra.mxu0 %v517
    %930 = vmatprep.subr.bf16.mxu0 0
    %931 = vmatpush2.bf16.msra.mxu0 %v516
    %932 = vmatprep.subr.bf16.mxu0 0
    %933 = vmatpush2.bf16.msra.mxu0 %v515
    %934 = vmatprep.subr.bf16.mxu0 0
    %935 = vmatpush2.bf16.msra.mxu0 %v514
    %936 = vmatprep.mubr.bf16.mxu0 %v811
    %937 = vmatmul.mubr.bf16.gmra.mxu0 %v797
    %v938 = vpop.f32.mrf.mxu0
    %v939 = vadd.f32 %v899, %v938
    %v940 = vpop.f32.mrf.mxu0
    %v941 = vpop.f32.mrf.mxu0
    %v942 = vpop.f32.mrf.mxu0
    %943 = vdwg.mxu0
    %944 = vmatprep.subr.bf16.mxu0 0
    %945 = vmatpush1.bf16.msra.mxu0 %v529
    %946 = vmatprep.subr.bf16.mxu0 0
    %947 = vmatpush1.bf16.msra.mxu0 %v528
    %948 = vmatprep.subr.bf16.mxu0 0
    %949 = vmatpush1.bf16.msra.mxu0 %v527
    %950 = vmatprep.subr.bf16.mxu0 0
    %951 = vmatpush1.bf16.msra.mxu0 %v526
    %952 = vmatprep.subr.bf16.mxu0 0
    %953 = vmatpush1.bf16.msra.mxu0 %v525
    %954 = vmatprep.subr.bf16.mxu0 0
    %955 = vmatpush1.bf16.msra.mxu0 %v524
    %956 = vmatprep.subr.bf16.mxu0 0
    %957 = vmatpush1.bf16.msra.mxu0 %v523
    %958 = vmatprep.subr.bf16.mxu0 0
    %959 = vmatpush1.bf16.msra.mxu0 %v522
    %960 = vmatprep.subr.bf16.mxu0 0
    %961 = vmatpush2.bf16.msra.mxu0 %v537
    %962 = vmatprep.subr.bf16.mxu0 0
    %963 = vmatpush2.bf16.msra.mxu0 %v536
    %964 = vmatprep.subr.bf16.mxu0 0
    %965 = vmatpush2.bf16.msra.mxu0 %v535
    %966 = vmatprep.subr.bf16.mxu0 0
    %967 = vmatpush2.bf16.msra.mxu0 %v534
    %968 = vmatprep.subr.bf16.mxu0 0
    %969 = vmatpush2.bf16.msra.mxu0 %v533
    %970 = vmatprep.subr.bf16.mxu0 0
    %971 = vmatpush2.bf16.msra.mxu0 %v532
    %972 = vmatprep.subr.bf16.mxu0 0
    %973 = vmatpush2.bf16.msra.mxu0 %v531
    %974 = vmatprep.subr.bf16.mxu0 0
    %975 = vmatpush2.bf16.msra.mxu0 %v530
    %976 = vmatprep.mubr.bf16.mxu0 %v815
    %977 = vmatmul.mubr.bf16.gmra.mxu0 %v813
    %v978 = vpop.f32.mrf.mxu0
    %v979 = vadd.f32 %v939, %v978
    %v980 = vpop.f32.mrf.mxu0
    %v981 = vpop.f32.mrf.mxu0
    %v982 = vpop.f32.mrf.mxu0
    %983 = vdwg.mxu0
    %v984 = vadd.f32 %v764, %v979
    %985 = vst [vmem:[#allocation3] sm:$0x3] %v984
    // Predicated region
    $region26: #{_fused_loss.1} parent=1 // pred_check
      %p986 = pneg %p24
    $region27: #{_fused_loss.1} parent=1 // pred_check_branch
      %988 = sbr.rel (%p986) target = $region29
    $region28: #{_fused_loss.1} parent=1 // pred_region
      %v989 = vld [vmem:[%s4] sm:$0x1]
      %v990 = vld [vmem:[%s5] sm:$0x1]
      %v991 = vld [vmem:[#allocation2] sm:$0x3]
      %v993 = vlaneseq
      %v994 = vshrl.u32 %v993, 7
      %v995 = vsub.s32 0, %v994
      %v996 = vrot.slane %v989, %v995
      %v998 = vmul.f32 %v991, %v996
      %v1000 = vlaneseq
      %v1001 = vshrl.u32 %v1000, 7
      %v1002 = vsub.s32 0, %v1001
      %v1003 = vrot.slane %v990, %v1002
      %v1005 = vadd.f32 %v998, %v1003
      %v1006 = vld [vmem:[#allocation3] sm:$0x3]
      %v1007 = vmul.f32 %v1006, %v996
      %v1008 = vadd.f32 %v1007, %v1003
      %v1009 = vmul.f32 %v1005, %v1005
      %vm1010 = vcmask 1041408
      %v1011 = vsel %vm1010, %v1009, 0.0
      %1012 = vadd.xlane.f32.xlu0 %v1011
      %v1013 = vpop.xlane.xlu0 %1012
      %v1014 = vmax.f32 %v1013, 1e-24
      %v1015 = vrsqrt.pop %v1014
      %v1016 = vmul.f32 %v1008, %v1008
      %v1017 = vsel %vm1010, %v1016, 0.0
      %1018 = vadd.xlane.f32.xlu0 %v1017
      %v1019 = vpop.xlane.xlu0 %1018
      %v1020 = vmax.f32 %v1019, 1e-24
      %v1021 = vrsqrt.pop %v1020
      %v1022 = vmul.f32 %v1005, %v1015
      %v1023 = vmul.f32 %v1008, %v1021
      %v1024 = vsub.f32 %v1022, %v1023
      %v1025 = vadd.f32 %v1024, 1e-06
      %v1026 = vmul.f32 %v1025, %v1025
      %v1027 = vsel %vm1010, %v1026, 0.0
      %1028 = vadd.xlane.f32.xlu0 %v1027
      %v1029 = vpop.xlane.xlu0 %1028
      %v1030 = vrsqrt.pop %v1029
      %v1031 = vmul.f32 %v1029, %v1030
      %vm1032 = vcmp.eq.f32.partialorder %v1029, inf
      %v1033 = vsel %vm1032, %v1029, %v1031
      %vm1034 = vcmp.eq.f32.partialorder %v1029, 0.0
      %v1035 = vand.u32 %v1029, 2147483648
      %v1036 = vsel %vm1034, %v1035, %v1033
      %s1037 = sld [smem:[#allocation5]]
      %s1038 = scvt.s32.f32 %s1037
      %s1039 = ssub.f32 1.0, %s1038
      %v1040 = vstv %s1039
      %v1041 = vmul.f32 %v1040, %v1029
      %v1042 = vsub.f32 2.0, %v1036
      %v1043 = vmax.f32 %v1042, 0.0
      %v1044 = vmul.f32 %v1043, %v1043
      %v1045 = vstv %s1038
      %v1046 = vmul.f32 %v1045, %v1044
      %v1047 = vadd.f32 %v1041, %v1046
      %vm1048 = vcmask 1024
      %v1049 = vsel %vm1048, %v1047, 0.0
      %1050 = vadd.xlane.f32.xlu0 %v1049
      %v1051 = vpop.xlane.xlu0 %1050
      %v1052 = vrot.slane %v1051, 4
      %v1053 = vadd.f32 %v1051, %v1052
      %v1054 = vrot.slane %v1053, 2
      %v1055 = vadd.f32 %v1053, %v1054
      %v1056 = vrot.slane %v1055, 1
      %v1057 = vadd.f32 %v1055, %v1056
      %s1058 = vtos %v1057
      %v1059 = vstv %s1058
      %v1060 = vrcp.pop 2.0
      %v1061 = vmul.f32 %v1059, %v1060
      %vm1062 = vcmask 0
      %1063 = vst.msk [vmem:[#allocation6] sm:$0x1] %vm1062, %v1061
    $region29: #{_fused_loss.1} parent=1 // pred_fallthru
      _
    // Predicated region
    $region30: #{_fused_loss.1} parent=1 // pred_check
      _
    $region31: #{_fused_loss.1} parent=1 // pred_check_branch
      %1065 = sbr.rel (0) target = $region33
    $region32: #{_fused_loss.1} parent=1 // pred_region
      %s1067 = ssub.s32 16, 16
      %1068 = vsyncadd [#allocation7], %s1067
      %s1070 = sshll.u32 [#allocation6], 4
      %s1071 = int_to_ptr.vmem [resolvable:$true] %s1070
      %1073 = dma.vmem_to_hbm [thread:$0]  %s1071, 16, %s6, [#allocation7]
    $region33: #{_fused_loss.1} parent=1 // pred_fallthru
      _
    // Predicated region
    $region34: #{_fused_loss.1} parent=1 // pred_check
      _
    $region35: #{_fused_loss.1} parent=1 // pred_check_branch
      %1075 = sbr.rel (0) target = $region37
    $region36: #{_fused_loss.1} parent=1 // pred_region
      %1076 = dma.done [#allocation7], 16
    $region37: #{_fused_loss.1} parent=1 // pred_fallthru
      _
    %1077 = vsyncpa [#allocation7], 1

</llo_original>
